<compile_context>
chip_gen: v5e
topology: v5e:2x2
jax: 0.10.0
libtpu: 0.0.40
codegen_flags: <defaults>
</compile_context>

<pallas_src>
import functools

import jax
import jax.numpy as jnp
from jax.experimental import pallas as pl
from jax.experimental.pallas import tpu as pltpu

H = 100    # true hidden width of the module
HP = 128   # lane-padded hidden width


def _round_up(x, m):
    return (x + m - 1) // m * m


# ----------------------------------------------------------------------------
# Kernel: one batch tile per grid step, batch on lanes.
# ----------------------------------------------------------------------------
def bbb_mlp_kernel(x_ref, w2_ref, w1_ref, b1_ref, b2_ref, w3_ref, b3_ref,
                   out_ref):
    x = x_ref[...]                                               # (1, TM) f32

    # ---- Layer 1: 1 -> HP.  Outer-product broadcast + ReLU. ----
    h = jnp.maximum(w1_ref[...] * x + b1_ref[...], 0.0)         # (HP, TM)

    # ---- Layer 2: HP -> HP.  bf16 MXU matmul, f32 accumulate, ReLU. ----
    h = jnp.dot(w2_ref[...], h.astype(jnp.bfloat16),
                preferred_element_type=jnp.float32) + b2_ref[...]
    h = jnp.maximum(h, 0.0)                                      # (HP, TM)

    # ---- Layer 3: HP -> 1.  Weighted sublane reduction (lane-dense out). ----
    out_ref[...] = (jnp.sum(h * w3_ref[...], axis=0, keepdims=True)
                    + b3_ref[...])                               # (1, TM)


# ----------------------------------------------------------------------------
# Wrapper-side sampling + padding (elementwise; identical to module math)
# ----------------------------------------------------------------------------
def _sample(mu, rho, eps):
    return mu + jax.nn.softplus(rho) * eps


def _pad_col(v):
    """(k,) -> (HP, 1) zero-padded column."""
    return jnp.pad(v.astype(jnp.float32), (0, HP - v.shape[0]))[:, None]


def _pad2(a):
    """(r, c) -> (HP, HP) zero-padded."""
    r, c = a.shape
    return jnp.pad(a.astype(jnp.float32), ((0, HP - r), (0, HP - c)))


def sample_and_pack(l1, l2, l3):
    """Sample all BBBLinear weights/biases and pad them for the kernel."""
    w1 = _sample(l1["mu_w"], l1["rho_w"], l1["eps_w"])   # (H, 1)
    b1 = _sample(l1["mu_b"], l1["rho_b"], l1["eps_b"])   # (H,)
    w2 = _sample(l2["mu_w"], l2["rho_w"], l2["eps_w"])   # (H, H)  (out, in)
    b2 = _sample(l2["mu_b"], l2["rho_b"], l2["eps_b"])   # (H,)
    w3 = _sample(l3["mu_w"], l3["rho_w"], l3["eps_w"])   # (1, H)
    b3 = _sample(l3["mu_b"], l3["rho_b"], l3["eps_b"])   # (1,)
    return (
        _pad2(w2).astype(jnp.bfloat16),          # (HP, HP)  MXU operand
        _pad_col(w1[:, 0]),                      # (HP, 1)
        _pad_col(b1),                            # (HP, 1)
        _pad_col(b2),                            # (HP, 1)
        _pad_col(w3[0, :]),                      # (HP, 1)
        b3.astype(jnp.float32).reshape(1, 1),    # (1, 1)
    )


# ----------------------------------------------------------------------------
# pallas_call wrapper
# ----------------------------------------------------------------------------
def bbb_mlp_forward(x, l1, l2, l3, *, tile_m=4096):
    """x: (N, 1) float32.  l1/l2/l3: dicts of BBBLinear params (PyTorch layout)."""
    n = x.shape[0]
    w2p, w1p, b1p, b2p, w3p, b3p = sample_and_pack(l1, l2, l3)

    # Lane-dense batch tiling: tm is a multiple of 128; small N collapses to
    # a single grid step.
    tm = _round_up(min(tile_m, _round_up(n, 128)), 128)
    n_pad = _round_up(n, tm)
    num_tiles = n_pad // tm
    xr = jnp.pad(x[:, 0].astype(jnp.float32), (0, n_pad - n)).reshape(1, n_pad)

    out = pl.pallas_call(
        bbb_mlp_kernel,
        out_shape=jax.ShapeDtypeStruct((1, n_pad), jnp.float32),
        grid_spec=pltpu.PrefetchScalarGridSpec(
            num_scalar_prefetch=0,
            grid=(num_tiles,),
            in_specs=[
                pl.BlockSpec((1, tm), lambda i: (0, i)),    # x (batch on lanes)
                pl.BlockSpec((HP, HP), lambda i: (0, 0)),   # sampled W2 (resident)
                pl.BlockSpec((HP, 1), lambda i: (0, 0)),    # w1 column
                pl.BlockSpec((HP, 1), lambda i: (0, 0)),    # b1 column
                pl.BlockSpec((HP, 1), lambda i: (0, 0)),    # b2 column
                pl.BlockSpec((HP, 1), lambda i: (0, 0)),    # w3 column
                pl.BlockSpec((1, 1), lambda i: (0, 0)),     # b3 scalar
            ],
            out_specs=pl.BlockSpec((1, tm), lambda i: (0, i)),
        ),
        # Tiles are fully independent (all sampling hoisted to the wrapper),
        # so the batch axis can shard across TensorCores on v7x.
        compiler_params=pltpu.CompilerParams(
            dimension_semantics=("parallel",)),
    )(xr, w2p, w1p, b1p, b2p, w3p, b3p)

    return out[0, :n][:, None]


# ----------------------------------------------------------------------------
# Pure-JAX reference (unpadded, same math as the PyTorch module's forward)
# ----------------------------------------------------------------------------
def bbb_mlp_reference(x, l1, l2, l3):
    def layer(h, p):
        w = p["mu_w"] + jax.nn.softplus(p["rho_w"]) * p["eps_w"]
        b = p["mu_b"] + jax.nn.softplus(p["rho_b"]) * p["eps_b"]
        return h @ w.T + b
    h = jax.nn.relu(layer(x, l1))
    h = jax.nn.relu(layer(h, l2))
    return layer(h, l3)


def init_bbb_linear_params(key, in_f, out_f):
    """One BBBLinear layer's parameters + noise, in PyTorch layout."""
    ks = jax.random.split(key, 6)
    return dict(
        mu_w=jax.random.uniform(ks[0], (out_f, in_f), jnp.float32, -0.2, 0.2),
        rho_w=jax.random.uniform(ks[1], (out_f, in_f), jnp.float32, -5.0, -4.0),
        eps_w=jax.random.normal(ks[2], (out_f, in_f), jnp.float32),
        mu_b=jax.random.uniform(ks[3], (out_f,), jnp.float32, -0.2, 0.2),
        rho_b=jax.random.uniform(ks[4], (out_f,), jnp.float32, -5.0, -4.0),
        eps_b=jax.random.normal(ks[5], (out_f,), jnp.float32),
    )


if __name__ == "__main__":
    key = jax.random.PRNGKey(0)
    k_x, k1, k2, k3 = jax.random.split(key, 4)

    l1 = init_bbb_linear_params(k1, 1, H)
    l2 = init_bbb_linear_params(k2, H, H)
    l3 = init_bbb_linear_params(k3, H, 1)

    # Small, single-tile case.
    batch = 8
    x = jax.random.normal(k_x, (batch, 1), jnp.float32)

    fwd = jax.jit(bbb_mlp_forward)
    out = fwd(x, l1, l2, l3)
    jax.block_until_ready(out)
    assert out.shape == (batch, 1) and out.dtype == jnp.float32

    ref = jax.jit(bbb_mlp_reference)(x, l1, l2, l3)
    jax.block_until_ready(ref)
    # bf16 MXU feed -> slightly loosened tolerance vs the pure-f32 reference.
    assert jnp.allclose(out, ref, rtol=2e-2, atol=2e-2), (out, ref)

    # Multi-tile grid path (300 rows, tile_m=128 -> 3 grid steps).
    batch2 = 300
    x2 = jax.random.normal(jax.random.PRNGKey(1), (batch2, 1), jnp.float32)
    fwd_tiled = jax.jit(functools.partial(bbb_mlp_forward, tile_m=128))
    out2 = fwd_tiled(x2, l1, l2, l3)
    jax.block_until_ready(out2)
    ref2 = jax.jit(bbb_mlp_reference)(x2, l1, l2, l3)
    jax.block_until_ready(ref2)
    assert out2.shape == (batch2, 1)
    assert jnp.allclose(out2, ref2, rtol=2e-2, atol=2e-2), (out2, ref2)

    print("KERNEL_OK")
</pallas_src>

<mosaic_0001>
module attributes {stable_mosaic.version = 11 : i64} {
  func.func @bbb_mlp_kernel(%arg0: i32, %arg1: memref<1x128xf32, #tpu.memory_space<vmem>>, %arg2: memref<128x128xbf16, #tpu.memory_space<vmem>>, %arg3: memref<128x1xf32, #tpu.memory_space<vmem>>, %arg4: memref<128x1xf32, #tpu.memory_space<vmem>>, %arg5: memref<128x1xf32, #tpu.memory_space<vmem>>, %arg6: memref<128x1xf32, #tpu.memory_space<vmem>>, %arg7: memref<1x1xf32, #tpu.memory_space<vmem>>, %arg8: memref<1x128xf32, #tpu.memory_space<vmem>>) attributes {dimension_semantics = [#tpu.dimension_semantics<parallel>], iteration_bounds = array<i64: 1>, scalar_prefetch = 0 : i64, scratch_operands = 0 : i64, tpu.core_type = #tpu.core_type<tc>, window_params = [{transform_indices = @transform_0, window_bounds = array<i64: 1, 128>}, {pipeline_mode = #tpu.pipeline_mode<synchronous>, transform_indices = @transform_1, window_bounds = array<i64: 128, 128>}, {pipeline_mode = #tpu.pipeline_mode<synchronous>, transform_indices = @transform_2, window_bounds = array<i64: 128, 1>}, {pipeline_mode = #tpu.pipeline_mode<synchronous>, transform_indices = @transform_3, window_bounds = array<i64: 128, 1>}, {pipeline_mode = #tpu.pipeline_mode<synchronous>, transform_indices = @transform_4, window_bounds = array<i64: 128, 1>}, {pipeline_mode = #tpu.pipeline_mode<synchronous>, transform_indices = @transform_5, window_bounds = array<i64: 128, 1>}, {pipeline_mode = #tpu.pipeline_mode<synchronous>, transform_indices = @transform_6, window_bounds = array<i64: 1, 1>}, {transform_indices = @transform_7, window_bounds = array<i64: 1, 128>}]} {
    %c0 = arith.constant 0 : index
    %c0_0 = arith.constant 0 : index
    %0 = vector.load %arg1[%c0, %c0_0] : memref<1x128xf32, #tpu.memory_space<vmem>>, vector<1x128xf32>
    %c0_1 = arith.constant 0 : index
    %c0_2 = arith.constant 0 : index
    %1 = vector.load %arg3[%c0_1, %c0_2] : memref<128x1xf32, #tpu.memory_space<vmem>>, vector<128x1xf32>
    %2 = vector.broadcast %1 : vector<128x1xf32> to vector<128x128xf32>
    %3 = vector.broadcast %0 : vector<1x128xf32> to vector<128x128xf32>
    %4 = arith.mulf %2, %3 : vector<128x128xf32>
    %c0_3 = arith.constant 0 : index
    %c0_4 = arith.constant 0 : index
    %5 = vector.load %arg4[%c0_3, %c0_4] : memref<128x1xf32, #tpu.memory_space<vmem>>, vector<128x1xf32>
    %6 = vector.broadcast %5 : vector<128x1xf32> to vector<128x128xf32>
    %7 = arith.addf %4, %6 : vector<128x128xf32>
    %cst = arith.constant 0.000000e+00 : f32
    %8 = vector.broadcast %cst : f32 to vector<128x128xf32>
    %9 = arith.maximumf %7, %8 : vector<128x128xf32>
    %c0_5 = arith.constant 0 : index
    %c0_6 = arith.constant 0 : index
    %10 = vector.load %arg2[%c0_5, %c0_6] : memref<128x128xbf16, #tpu.memory_space<vmem>>, vector<128x128xbf16>
    %11 = arith.truncf %9 : vector<128x128xf32> to vector<128x128xbf16>
    %cst_7 = arith.constant dense<0.000000e+00> : vector<128x128xf32>
    %12 = tpu.matmul %10, %11, %cst_7 {dimension_numbers = #tpu.dot_dimension_numbers<[1], [0], [0], [1], [0, 0, 1, 1], [], []>} : vector<128x128xbf16>, vector<128x128xbf16>, vector<128x128xf32> -> vector<128x128xf32>
    %c0_8 = arith.constant 0 : index
    %c0_9 = arith.constant 0 : index
    %13 = vector.load %arg5[%c0_8, %c0_9] : memref<128x1xf32, #tpu.memory_space<vmem>>, vector<128x1xf32>
    %14 = vector.broadcast %13 : vector<128x1xf32> to vector<128x128xf32>
    %15 = arith.addf %12, %14 : vector<128x128xf32>
    %cst_10 = arith.constant 0.000000e+00 : f32
    %16 = vector.broadcast %cst_10 : f32 to vector<128x128xf32>
    %17 = arith.maximumf %15, %16 : vector<128x128xf32>
    %c0_11 = arith.constant 0 : index
    %c0_12 = arith.constant 0 : index
    %18 = vector.load %arg6[%c0_11, %c0_12] : memref<128x1xf32, #tpu.memory_space<vmem>>, vector<128x1xf32>
    %19 = vector.broadcast %18 : vector<128x1xf32> to vector<128x128xf32>
    %20 = arith.mulf %17, %19 : vector<128x128xf32>
    %cst_13 = arith.constant dense<0.000000e+00> : vector<128xf32>
    %21 = vector.multi_reduction <add>, %20, %cst_13 [0] : vector<128x128xf32> to vector<128xf32>
    %22 = vector.shape_cast %21 : vector<128xf32> to vector<1x128xf32>
    %c0_14 = arith.constant 0 : index
    %c0_15 = arith.constant 0 : index
    %23 = vector.load %arg7[%c0_14, %c0_15] : memref<1x1xf32, #tpu.memory_space<vmem>>, vector<1x1xf32>
    %24 = vector.broadcast %23 : vector<1x1xf32> to vector<1x128xf32>
    %25 = arith.addf %22, %24 : vector<1x128xf32>
    %c0_16 = arith.constant 0 : index
    %c0_17 = arith.constant 0 : index
    %26 = vector.load %arg8[%c0_16, %c0_17] : memref<1x128xf32, #tpu.memory_space<vmem>>, vector<1x128xf32>
    tpu.vector_store %arg8[%c0_16, %c0_17], %25 {strides = array<i32>} : memref<1x128xf32, #tpu.memory_space<vmem>>, vector<1x128xf32>,
    return
  }
  func.func @transform_0(%arg0: i32) -> (i32, i32) {
    %c0_i32 = arith.constant 0 : i32
    %c0_i32_0 = arith.constant 0 : i32
    return %c0_i32, %arg0 : i32, i32
  }
  func.func @transform_1(%arg0: i32) -> (i32, i32) {
    %c0_i32 = arith.constant 0 : i32
    %c0_i32_0 = arith.constant 0 : i32
    %c0_i32_1 = arith.constant 0 : i32
    return %c0_i32, %c0_i32_0 : i32, i32
  }
  func.func @transform_2(%arg0: i32) -> (i32, i32) {
    %c0_i32 = arith.constant 0 : i32
    %c0_i32_0 = arith.constant 0 : i32
    %c0_i32_1 = arith.constant 0 : i32
    return %c0_i32, %c0_i32_0 : i32, i32
  }
  func.func @transform_3(%arg0: i32) -> (i32, i32) {
    %c0_i32 = arith.constant 0 : i32
    %c0_i32_0 = arith.constant 0 : i32
    %c0_i32_1 = arith.constant 0 : i32
    return %c0_i32, %c0_i32_0 : i32, i32
  }
  func.func @transform_4(%arg0: i32) -> (i32, i32) {
    %c0_i32 = arith.constant 0 : i32
    %c0_i32_0 = arith.constant 0 : i32
    %c0_i32_1 = arith.constant 0 : i32
    return %c0_i32, %c0_i32_0 : i32, i32
  }
  func.func @transform_5(%arg0: i32) -> (i32, i32) {
    %c0_i32 = arith.constant 0 : i32
    %c0_i32_0 = arith.constant 0 : i32
    %c0_i32_1 = arith.constant 0 : i32
    return %c0_i32, %c0_i32_0 : i32, i32
  }
  func.func @transform_6(%arg0: i32) -> (i32, i32) {
    %c0_i32 = arith.constant 0 : i32
    %c0_i32_0 = arith.constant 0 : i32
    %c0_i32_1 = arith.constant 0 : i32
    return %c0_i32, %c0_i32_0 : i32, i32
  }
  func.func @transform_7(%arg0: i32) -> (i32, i32) {
    %c0_i32 = arith.constant 0 : i32
    %c0_i32_0 = arith.constant 0 : i32
    return %c0_i32, %arg0 : i32, i32
  }
}

</mosaic_0001>

<llo_original>
// kernel: bbb_mlp_forward.1
$region0: #{bbb_mlp_forward.1}
  #allocation0 [shape = 'u32[]', space=smem, size = 0x4, offset = 0x4, fixed_abs, tag = 'smem constant byte address 0x4 - core index']
  #allocation1 [shape = 'u32[72,128]{1,0:T(1,128)}', space=vmem, size = 0x9000, scoped, tag = 'internal scratch']
  #allocation2 [shape = 'f32[1,1]{1,0:T(1,128)S(1)}', space=vmem, size = 0x200, scoped, tag = 'scoped memory for bbb_mlp_forward.1']
  %s0 = inlined_call_operand.vmem [shape: f32[1,128], index: 0, kind: input, shape index: {}]
  %s1 = inlined_call_operand.vmem [shape: bf16[128,128], index: 1, kind: input, shape index: {}]
  %s2 = inlined_call_operand.vmem [shape: f32[128,1], index: 2, kind: input, shape index: {}]
  %s3 = inlined_call_operand.vmem [shape: f32[128,1], index: 3, kind: input, shape index: {}]
  %s4 = inlined_call_operand.vmem [shape: f32[128,1], index: 4, kind: input, shape index: {}]
  %s5 = inlined_call_operand.vmem [shape: f32[128,1], index: 5, kind: input, shape index: {}]
  %s6 = inlined_call_operand.<no memory space> [shape: f32[1,1], index: 6, kind: input, shape index: {}]
  %s7 = inlined_call_operand.vmem [shape: f32[1,128], index: 7, kind: output, shape index: {}]
  %s8 = sld [smem:[#allocation0]]
  $region38: #{bbb_mlp_forward.1} parent=0
    _
  %s10 = ssub.s32 1, %s8
  %s11 = scalar_select 0, %s10, %s8
  %v12 = vstv %s6
  %13 = vst [vmem:[#allocation2] sm:$0x1] %v12
  // Predicated region
  $region2: #{bbb_mlp_forward.1} parent=0 // pred_check
    _
  $region3: #{bbb_mlp_forward.1} parent=0 // pred_check_branch
    %15 = sbr.rel (0) target = $region5
  $region4: #{bbb_mlp_forward.1} parent=0 // pred_region
    _
  $region5: #{bbb_mlp_forward.1} parent=0 // pred_fallthru
    _
  // Predicated region
  $region6: #{bbb_mlp_forward.1} parent=0 // pred_check
    _
  $region7: #{bbb_mlp_forward.1} parent=0 // pred_check_branch
    %17 = sbr.rel (0) target = $region9
  $region8: #{bbb_mlp_forward.1} parent=0 // pred_region
    _
  $region9: #{bbb_mlp_forward.1} parent=0 // pred_fallthru
    _
  // Predicated region
  $region10: #{bbb_mlp_forward.1} parent=0 // pred_check
    _
  $region11: #{bbb_mlp_forward.1} parent=0 // pred_check_branch
    %19 = sbr.rel (0) target = $region13
  $region12: #{bbb_mlp_forward.1} parent=0 // pred_region
    _
  $region13: #{bbb_mlp_forward.1} parent=0 // pred_fallthru
    _
  // Predicated region
  $region14: #{bbb_mlp_forward.1} parent=0 // pred_check
    _
  $region15: #{bbb_mlp_forward.1} parent=0 // pred_check_branch
    %21 = sbr.rel (0) target = $region17
  $region16: #{bbb_mlp_forward.1} parent=0 // pred_region
    _
  $region17: #{bbb_mlp_forward.1} parent=0 // pred_fallthru
    _
  // Predicated region
  $region18: #{bbb_mlp_forward.1} parent=0 // pred_check
    _
  $region19: #{bbb_mlp_forward.1} parent=0 // pred_check_branch
    %23 = sbr.rel (0) target = $region21
  $region20: #{bbb_mlp_forward.1} parent=0 // pred_region
    _
  $region21: #{bbb_mlp_forward.1} parent=0 // pred_fallthru
    _
  // Predicated region
  $region22: #{bbb_mlp_forward.1} parent=0 // pred_check
    _
  $region23: #{bbb_mlp_forward.1} parent=0 // pred_check_branch
    %25 = sbr.rel (0) target = $region25
  $region24: #{bbb_mlp_forward.1} parent=0 // pred_region
    _
  $region25: #{bbb_mlp_forward.1} parent=0 // pred_fallthru
    _
  // Predicated region
  $region26: #{bbb_mlp_forward.1} parent=0 // pred_check
    _
  $region27: #{bbb_mlp_forward.1} parent=0 // pred_check_branch
    %27 = sbr.rel (0) target = $region29
  $region28: #{bbb_mlp_forward.1} parent=0 // pred_region
    _
  $region29: #{bbb_mlp_forward.1} parent=0 // pred_fallthru
    _
  %v28 = vld [vmem:[%s0] sm:$0x1]
  %v29 = vld [vmem:[%s2] sm:$0xff]
  %v30 = vld [vmem:[%s2 + $0x8] sm:$0xff]
  %v31 = vld [vmem:[%s2 + $0x10] sm:$0xff]
  %v32 = vld [vmem:[%s2 + $0x18] sm:$0xff]
  %v33 = vld [vmem:[%s2 + $0x20] sm:$0xff]
  %v34 = vld [vmem:[%s2 + $0x28] sm:$0xff]
  %v35 = vld [vmem:[%s2 + $0x30] sm:$0xff]
  %v36 = vld [vmem:[%s2 + $0x38] sm:$0xff]
  %v37 = vld [vmem:[%s2 + $0x40] sm:$0xff]
  %v38 = vld [vmem:[%s2 + $0x48] sm:$0xff]
  %v39 = vld [vmem:[%s2 + $0x50] sm:$0xff]
  %v40 = vld [vmem:[%s2 + $0x58] sm:$0xff]
  %v41 = vld [vmem:[%s2 + $0x60] sm:$0xff]
  %v42 = vld [vmem:[%s2 + $0x68] sm:$0xff]
  %v43 = vld [vmem:[%s2 + $0x70] sm:$0xff]
  %v44 = vld [vmem:[%s2 + $0x78] sm:$0xff]
  %46 = vset.pattern.permute.xlu0 0
  %47 = vperm.xlu0 %46, %v29
  %v48 = vpop.permute.xlu0 %47
  %51 = vset.pattern.permute.xlu0 0
  %52 = vperm.xlu0 %51, %v30
  %v53 = vpop.permute.xlu0 %52
  %56 = vset.pattern.permute.xlu0 0
  %57 = vperm.xlu0 %56, %v31
  %v58 = vpop.permute.xlu0 %57
  %61 = vset.pattern.permute.xlu0 0
  %62 = vperm.xlu0 %61, %v32
  %v63 = vpop.permute.xlu0 %62
  %66 = vset.pattern.permute.xlu0 0
  %67 = vperm.xlu0 %66, %v33
  %v68 = vpop.permute.xlu0 %67
  %71 = vset.pattern.permute.xlu0 0
  %72 = vperm.xlu0 %71, %v34
  %v73 = vpop.permute.xlu0 %72
  %76 = vset.pattern.permute.xlu0 0
  %77 = vperm.xlu0 %76, %v35
  %v78 = vpop.permute.xlu0 %77
  %81 = vset.pattern.permute.xlu0 0
  %82 = vperm.xlu0 %81, %v36
  %v83 = vpop.permute.xlu0 %82
  %86 = vset.pattern.permute.xlu0 0
  %87 = vperm.xlu0 %86, %v37
  %v88 = vpop.permute.xlu0 %87
  %91 = vset.pattern.permute.xlu0 0
  %92 = vperm.xlu0 %91, %v38
  %v93 = vpop.permute.xlu0 %92
  %96 = vset.pattern.permute.xlu0 0
  %97 = vperm.xlu0 %96, %v39
  %v98 = vpop.permute.xlu0 %97
  %101 = vset.pattern.permute.xlu0 0
  %102 = vperm.xlu0 %101, %v40
  %v103 = vpop.permute.xlu0 %102
  %106 = vset.pattern.permute.xlu0 0
  %107 = vperm.xlu0 %106, %v41
  %v108 = vpop.permute.xlu0 %107
  %111 = vset.pattern.permute.xlu0 0
  %112 = vperm.xlu0 %111, %v42
  %v113 = vpop.permute.xlu0 %112
  %116 = vset.pattern.permute.xlu0 0
  %117 = vperm.xlu0 %116, %v43
  %v118 = vpop.permute.xlu0 %117
  %121 = vset.pattern.permute.xlu0 0
  %122 = vperm.xlu0 %121, %v44
  %v123 = vpop.permute.xlu0 %122
  %v126 = vperm.slane %v28, 0
  %v128 = vmul.f32 %v48, %v126
  %v129 = vmul.f32 %v53, %v126
  %v130 = vmul.f32 %v58, %v126
  %v131 = vmul.f32 %v63, %v126
  %v132 = vmul.f32 %v68, %v126
  %v133 = vmul.f32 %v73, %v126
  %v134 = vmul.f32 %v78, %v126
  %v135 = vmul.f32 %v83, %v126
  %v136 = vmul.f32 %v88, %v126
  %v137 = vmul.f32 %v93, %v126
  %v138 = vmul.f32 %v98, %v126
  %v139 = vmul.f32 %v103, %v126
  %v140 = vmul.f32 %v108, %v126
  %v141 = vmul.f32 %v113, %v126
  %v142 = vmul.f32 %v118, %v126
  %v143 = vmul.f32 %v123, %v126
  %v144 = vld [vmem:[%s3] sm:$0xff]
  %v145 = vld [vmem:[%s3 + $0x8] sm:$0xff]
  %v146 = vld [vmem:[%s3 + $0x10] sm:$0xff]
  %v147 = vld [vmem:[%s3 + $0x18] sm:$0xff]
  %v148 = vld [vmem:[%s3 + $0x20] sm:$0xff]
  %v149 = vld [vmem:[%s3 + $0x28] sm:$0xff]
  %v150 = vld [vmem:[%s3 + $0x30] sm:$0xff]
  %v151 = vld [vmem:[%s3 + $0x38] sm:$0xff]
  %v152 = vld [vmem:[%s3 + $0x40] sm:$0xff]
  %v153 = vld [vmem:[%s3 + $0x48] sm:$0xff]
  %v154 = vld [vmem:[%s3 + $0x50] sm:$0xff]
  %v155 = vld [vmem:[%s3 + $0x58] sm:$0xff]
  %v156 = vld [vmem:[%s3 + $0x60] sm:$0xff]
  %v157 = vld [vmem:[%s3 + $0x68] sm:$0xff]
  %v158 = vld [vmem:[%s3 + $0x70] sm:$0xff]
  %v159 = vld [vmem:[%s3 + $0x78] sm:$0xff]
  %161 = vset.pattern.permute.xlu0 0
  %162 = vperm.xlu0 %161, %v144
  %v163 = vpop.permute.xlu0 %162
  %166 = vset.pattern.permute.xlu0 0
  %167 = vperm.xlu0 %166, %v145
  %v168 = vpop.permute.xlu0 %167
  %171 = vset.pattern.permute.xlu0 0
  %172 = vperm.xlu0 %171, %v146
  %v173 = vpop.permute.xlu0 %172
  %176 = vset.pattern.permute.xlu0 0
  %177 = vperm.xlu0 %176, %v147
  %v178 = vpop.permute.xlu0 %177
  %181 = vset.pattern.permute.xlu0 0
  %182 = vperm.xlu0 %181, %v148
  %v183 = vpop.permute.xlu0 %182
  %186 = vset.pattern.permute.xlu0 0
  %187 = vperm.xlu0 %186, %v149
  %v188 = vpop.permute.xlu0 %187
  %191 = vset.pattern.permute.xlu0 0
  %192 = vperm.xlu0 %191, %v150
  %v193 = vpop.permute.xlu0 %192
  %196 = vset.pattern.permute.xlu0 0
  %197 = vperm.xlu0 %196, %v151
  %v198 = vpop.permute.xlu0 %197
  %201 = vset.pattern.permute.xlu0 0
  %202 = vperm.xlu0 %201, %v152
  %v203 = vpop.permute.xlu0 %202
  %206 = vset.pattern.permute.xlu0 0
  %207 = vperm.xlu0 %206, %v153
  %v208 = vpop.permute.xlu0 %207
  %211 = vset.pattern.permute.xlu0 0
  %212 = vperm.xlu0 %211, %v154
  %v213 = vpop.permute.xlu0 %212
  %216 = vset.pattern.permute.xlu0 0
  %217 = vperm.xlu0 %216, %v155
  %v218 = vpop.permute.xlu0 %217
  %221 = vset.pattern.permute.xlu0 0
  %222 = vperm.xlu0 %221, %v156
  %v223 = vpop.permute.xlu0 %222
  %226 = vset.pattern.permute.xlu0 0
  %227 = vperm.xlu0 %226, %v157
  %v228 = vpop.permute.xlu0 %227
  %231 = vset.pattern.permute.xlu0 0
  %232 = vperm.xlu0 %231, %v158
  %v233 = vpop.permute.xlu0 %232
  %236 = vset.pattern.permute.xlu0 0
  %237 = vperm.xlu0 %236, %v159
  %v238 = vpop.permute.xlu0 %237
  %v240 = vadd.f32 %v128, %v163
  %v241 = vadd.f32 %v129, %v168
  %v242 = vadd.f32 %v130, %v173
  %v243 = vadd.f32 %v131, %v178
  %v244 = vadd.f32 %v132, %v183
  %v245 = vadd.f32 %v133, %v188
  %v246 = vadd.f32 %v134, %v193
  %v247 = vadd.f32 %v135, %v198
  %v248 = vadd.f32 %v136, %v203
  %v249 = vadd.f32 %v137, %v208
  %v250 = vadd.f32 %v138, %v213
  %v251 = vadd.f32 %v139, %v218
  %v252 = vadd.f32 %v140, %v223
  %v253 = vadd.f32 %v141, %v228
  %v254 = vadd.f32 %v142, %v233
  %v255 = vadd.f32 %v143, %v238
  %v256 = vmax.f32 %v240, 0.0
  %v257 = vmax.f32 %v241, 0.0
  %v258 = vmax.f32 %v242, 0.0
  %v259 = vmax.f32 %v243, 0.0
  %v260 = vmax.f32 %v244, 0.0
  %v261 = vmax.f32 %v245, 0.0
  %v262 = vmax.f32 %v246, 0.0
  %v263 = vmax.f32 %v247, 0.0
  %v264 = vmax.f32 %v248, 0.0
  %v265 = vmax.f32 %v249, 0.0
  %v266 = vmax.f32 %v250, 0.0
  %v267 = vmax.f32 %v251, 0.0
  %v268 = vmax.f32 %v252, 0.0
  %v269 = vmax.f32 %v253, 0.0
  %v270 = vmax.f32 %v254, 0.0
  %v271 = vmax.f32 %v255, 0.0
  %v272 = vld [vmem:[%s1] sm:$0xf]
  %v273 = vld [vmem:[%s1 + $0x4] sm:$0xf]
  %v274 = vld [vmem:[%s1 + $0x8] sm:$0xf]
  %v275 = vld [vmem:[%s1 + $0xc] sm:$0xf]
  %v276 = vld [vmem:[%s1 + $0x10] sm:$0xf]
  %v277 = vld [vmem:[%s1 + $0x14] sm:$0xf]
  %v278 = vld [vmem:[%s1 + $0x18] sm:$0xf]
  %v279 = vld [vmem:[%s1 + $0x1c] sm:$0xf]
  %v280 = vld [vmem:[%s1 + $0x20] sm:$0xf]
  %v281 = vld [vmem:[%s1 + $0x24] sm:$0xf]
  %v282 = vld [vmem:[%s1 + $0x28] sm:$0xf]
  %v283 = vld [vmem:[%s1 + $0x2c] sm:$0xf]
  %v284 = vld [vmem:[%s1 + $0x30] sm:$0xf]
  %v285 = vld [vmem:[%s1 + $0x34] sm:$0xf]
  %v286 = vld [vmem:[%s1 + $0x38] sm:$0xf]
  %v287 = vld [vmem:[%s1 + $0x3c] sm:$0xf]
  %v288 = vpack.c.bf16 %v257, %v256
  %v289 = vpack.c.bf16 %v259, %v258
  %v290 = vpack.c.bf16 %v261, %v260
  %v291 = vpack.c.bf16 %v263, %v262
  %v292 = vpack.c.bf16 %v265, %v264
  %v293 = vpack.c.bf16 %v267, %v266
  %v294 = vpack.c.bf16 %v269, %v268
  %v295 = vpack.c.bf16 %v271, %v270
  %v296 = vld [vmem:[%s4] sm:$0xff]
  %v297 = vld [vmem:[%s4 + $0x8] sm:$0xff]
  %v298 = vld [vmem:[%s4 + $0x10] sm:$0xff]
  %v299 = vld [vmem:[%s4 + $0x18] sm:$0xff]
  %v300 = vld [vmem:[%s4 + $0x20] sm:$0xff]
  %v301 = vld [vmem:[%s4 + $0x28] sm:$0xff]
  %v302 = vld [vmem:[%s4 + $0x30] sm:$0xff]
  %v303 = vld [vmem:[%s4 + $0x38] sm:$0xff]
  %v304 = vld [vmem:[%s4 + $0x40] sm:$0xff]
  %v305 = vld [vmem:[%s4 + $0x48] sm:$0xff]
  %v306 = vld [vmem:[%s4 + $0x50] sm:$0xff]
  %v307 = vld [vmem:[%s4 + $0x58] sm:$0xff]
  %v308 = vld [vmem:[%s4 + $0x60] sm:$0xff]
  %v309 = vld [vmem:[%s4 + $0x68] sm:$0xff]
  %v310 = vld [vmem:[%s4 + $0x70] sm:$0xff]
  %v311 = vld [vmem:[%s4 + $0x78] sm:$0xff]
  %313 = vset.pattern.permute.xlu0 0
  %314 = vperm.xlu0 %313, %v296
  %v315 = vpop.permute.xlu0 %314
  %318 = vset.pattern.permute.xlu0 0
  %319 = vperm.xlu0 %318, %v297
  %v320 = vpop.permute.xlu0 %319
  %323 = vset.pattern.permute.xlu0 0
  %324 = vperm.xlu0 %323, %v298
  %v325 = vpop.permute.xlu0 %324
  %328 = vset.pattern.permute.xlu0 0
  %329 = vperm.xlu0 %328, %v299
  %v330 = vpop.permute.xlu0 %329
  %333 = vset.pattern.permute.xlu0 0
  %334 = vperm.xlu0 %333, %v300
  %v335 = vpop.permute.xlu0 %334
  %338 = vset.pattern.permute.xlu0 0
  %339 = vperm.xlu0 %338, %v301
  %v340 = vpop.permute.xlu0 %339
  %343 = vset.pattern.permute.xlu0 0
  %344 = vperm.xlu0 %343, %v302
  %v345 = vpop.permute.xlu0 %344
  %348 = vset.pattern.permute.xlu0 0
  %349 = vperm.xlu0 %348, %v303
  %v350 = vpop.permute.xlu0 %349
  %353 = vset.pattern.permute.xlu0 0
  %354 = vperm.xlu0 %353, %v304
  %v355 = vpop.permute.xlu0 %354
  %358 = vset.pattern.permute.xlu0 0
  %359 = vperm.xlu0 %358, %v305
  %v360 = vpop.permute.xlu0 %359
  %363 = vset.pattern.permute.xlu0 0
  %364 = vperm.xlu0 %363, %v306
  %v365 = vpop.permute.xlu0 %364
  %368 = vset.pattern.permute.xlu0 0
  %369 = vperm.xlu0 %368, %v307
  %v370 = vpop.permute.xlu0 %369
  %373 = vset.pattern.permute.xlu0 0
  %374 = vperm.xlu0 %373, %v308
  %v375 = vpop.permute.xlu0 %374
  %378 = vset.pattern.permute.xlu0 0
  %379 = vperm.xlu0 %378, %v309
  %v380 = vpop.permute.xlu0 %379
  %383 = vset.pattern.permute.xlu0 0
  %384 = vperm.xlu0 %383, %v310
  %v385 = vpop.permute.xlu0 %384
  %388 = vset.pattern.permute.xlu0 0
  %389 = vperm.xlu0 %388, %v311
  %v390 = vpop.permute.xlu0 %389
  %v408 = vunpack.c.l.b16 %v272
  %v409 = vunpack.c.l.b16 %v273
  %v410 = vunpack.c.l.b16 %v274
  %v411 = vunpack.c.l.b16 %v275
  %v412 = vunpack.c.l.b16 %v276
  %v413 = vunpack.c.l.b16 %v277
  %v414 = vunpack.c.l.b16 %v278
  %v415 = vunpack.c.l.b16 %v279
  %v416 = vunpack.c.l.b16 %v280
  %v417 = vunpack.c.l.b16 %v281
  %v418 = vunpack.c.l.b16 %v282
  %v419 = vunpack.c.l.b16 %v283
  %v420 = vunpack.c.l.b16 %v284
  %v421 = vunpack.c.l.b16 %v285
  %v422 = vunpack.c.l.b16 %v286
  %v423 = vunpack.c.l.b16 %v287
  %v424 = vpack.c.b16 %v409, %v408
  %v425 = vpack.c.b16 %v411, %v410
  %v426 = vpack.c.b16 %v413, %v412
  %v427 = vpack.c.b16 %v415, %v414
  %v428 = vpack.c.b16 %v417, %v416
  %v429 = vpack.c.b16 %v419, %v418
  %v430 = vpack.c.b16 %v421, %v420
  %v431 = vpack.c.b16 %v423, %v422
  %440 = vmatpush.bf16.msra.mxu0 %v295
  %441 = vmatpush.bf16.msra.mxu0 %v294
  %442 = vmatpush.bf16.msra.mxu0 %v293
  %443 = vmatpush.bf16.msra.mxu0 %v292
  %444 = vmatpush.bf16.msra.mxu0 %v291
  %445 = vmatpush.bf16.msra.mxu0 %v290
  %446 = vmatpush.bf16.msra.mxu0 %v289
  %447 = vmatpush.bf16.msra.mxu0 %v288
  %448 = vmatmul.bf16.gmra.mxu0 %v424
  %v449 = vpop.f32.mrf.mxu0
  %v450 = vadd.f32 %v315, %v449
  %v451 = vpop.f32.mrf.mxu0
  %v452 = vadd.f32 %v320, %v451
  %453 = vmatmul.bf16.gmra.mxu0 %v425
  %v454 = vpop.f32.mrf.mxu0
  %v455 = vadd.f32 %v325, %v454
  %v456 = vpop.f32.mrf.mxu0
  %v457 = vadd.f32 %v330, %v456
  %458 = vmatmul.bf16.gmra.mxu0 %v426
  %v459 = vpop.f32.mrf.mxu0
  %v460 = vadd.f32 %v335, %v459
  %v461 = vpop.f32.mrf.mxu0
  %v462 = vadd.f32 %v340, %v461
  %463 = vmatmul.bf16.gmra.mxu0 %v427
  %v464 = vpop.f32.mrf.mxu0
  %v465 = vadd.f32 %v345, %v464
  %v466 = vpop.f32.mrf.mxu0
  %v467 = vadd.f32 %v350, %v466
  %468 = vmatmul.bf16.gmra.mxu0 %v428
  %v469 = vpop.f32.mrf.mxu0
  %v470 = vadd.f32 %v355, %v469
  %v471 = vpop.f32.mrf.mxu0
  %v472 = vadd.f32 %v360, %v471
  %473 = vmatmul.bf16.gmra.mxu0 %v429
  %v474 = vpop.f32.mrf.mxu0
  %v475 = vadd.f32 %v365, %v474
  %v476 = vpop.f32.mrf.mxu0
  %v477 = vadd.f32 %v370, %v476
  %478 = vmatmul.bf16.gmra.mxu0 %v430
  %v479 = vpop.f32.mrf.mxu0
  %v480 = vadd.f32 %v375, %v479
  %v481 = vpop.f32.mrf.mxu0
  %v482 = vadd.f32 %v380, %v481
  %483 = vmatmul.bf16.gmra.mxu0 %v431
  %v484 = vpop.f32.mrf.mxu0
  %v485 = vadd.f32 %v385, %v484
  %v486 = vpop.f32.mrf.mxu0
  %v487 = vadd.f32 %v390, %v486
  %488 = vdwg.mxu0
  %v489 = vmax.f32 %v450, 0.0
  %v490 = vmax.f32 %v452, 0.0
  %v491 = vmax.f32 %v455, 0.0
  %v492 = vmax.f32 %v457, 0.0
  %v493 = vmax.f32 %v460, 0.0
  %v494 = vmax.f32 %v462, 0.0
  %v495 = vmax.f32 %v465, 0.0
  %v496 = vmax.f32 %v467, 0.0
  %v497 = vmax.f32 %v470, 0.0
  %v498 = vmax.f32 %v472, 0.0
  %v499 = vmax.f32 %v475, 0.0
  %v500 = vmax.f32 %v477, 0.0
  %v501 = vmax.f32 %v480, 0.0
  %v502 = vmax.f32 %v482, 0.0
  %v503 = vmax.f32 %v485, 0.0
  %v504 = vmax.f32 %v487, 0.0
  %v505 = vld [vmem:[%s5] sm:$0xff]
  %v506 = vld [vmem:[%s5 + $0x8] sm:$0xff]
  %v507 = vld [vmem:[%s5 + $0x10] sm:$0xff]
  %v508 = vld [vmem:[%s5 + $0x18] sm:$0xff]
  %v509 = vld [vmem:[%s5 + $0x20] sm:$0xff]
  %v510 = vld [vmem:[%s5 + $0x28] sm:$0xff]
  %v511 = vld [vmem:[%s5 + $0x30] sm:$0xff]
  %v512 = vld [vmem:[%s5 + $0x38] sm:$0xff]
  %v513 = vld [vmem:[%s5 + $0x40] sm:$0xff]
  %v514 = vld [vmem:[%s5 + $0x48] sm:$0xff]
  %v515 = vld [vmem:[%s5 + $0x50] sm:$0xff]
  %v516 = vld [vmem:[%s5 + $0x58] sm:$0xff]
  %v517 = vld [vmem:[%s5 + $0x60] sm:$0xff]
  %v518 = vld [vmem:[%s5 + $0x68] sm:$0xff]
  %v519 = vld [vmem:[%s5 + $0x70] sm:$0xff]
  %v520 = vld [vmem:[%s5 + $0x78] sm:$0xff]
  %522 = vset.pattern.permute.xlu0 0
  %523 = vperm.xlu0 %522, %v505
  %v524 = vpop.permute.xlu0 %523
  %527 = vset.pattern.permute.xlu0 0
  %528 = vperm.xlu0 %527, %v506
  %v529 = vpop.permute.xlu0 %528
  %532 = vset.pattern.permute.xlu0 0
  %533 = vperm.xlu0 %532, %v507
  %v534 = vpop.permute.xlu0 %533
  %537 = vset.pattern.permute.xlu0 0
  %538 = vperm.xlu0 %537, %v508
  %v539 = vpop.permute.xlu0 %538
  %542 = vset.pattern.permute.xlu0 0
  %543 = vperm.xlu0 %542, %v509
  %v544 = vpop.permute.xlu0 %543
  %547 = vset.pattern.permute.xlu0 0
  %548 = vperm.xlu0 %547, %v510
  %v549 = vpop.permute.xlu0 %548
  %552 = vset.pattern.permute.xlu0 0
  %553 = vperm.xlu0 %552, %v511
  %v554 = vpop.permute.xlu0 %553
  %557 = vset.pattern.permute.xlu0 0
  %558 = vperm.xlu0 %557, %v512
  %v559 = vpop.permute.xlu0 %558
  %562 = vset.pattern.permute.xlu0 0
  %563 = vperm.xlu0 %562, %v513
  %v564 = vpop.permute.xlu0 %563
  %567 = vset.pattern.permute.xlu0 0
  %568 = vperm.xlu0 %567, %v514
  %v569 = vpop.permute.xlu0 %568
  %572 = vset.pattern.permute.xlu0 0
  %573 = vperm.xlu0 %572, %v515
  %v574 = vpop.permute.xlu0 %573
  %577 = vset.pattern.permute.xlu0 0
  %578 = vperm.xlu0 %577, %v516
  %v579 = vpop.permute.xlu0 %578
  %582 = vset.pattern.permute.xlu0 0
  %583 = vperm.xlu0 %582, %v517
  %v584 = vpop.permute.xlu0 %583
  %587 = vset.pattern.permute.xlu0 0
  %588 = vperm.xlu0 %587, %v518
  %v589 = vpop.permute.xlu0 %588
  %592 = vset.pattern.permute.xlu0 0
  %593 = vperm.xlu0 %592, %v519
  %v594 = vpop.permute.xlu0 %593
  %597 = vset.pattern.permute.xlu0 0
  %598 = vperm.xlu0 %597, %v520
  %v599 = vpop.permute.xlu0 %598
  %v601 = vmul.f32 %v489, %v524
  %v602 = vmul.f32 %v490, %v529
  %v603 = vmul.f32 %v491, %v534
  %v604 = vmul.f32 %v492, %v539
  %v605 = vmul.f32 %v493, %v544
  %v606 = vmul.f32 %v494, %v549
  %v607 = vmul.f32 %v495, %v554
  %v608 = vmul.f32 %v496, %v559
  %v609 = vmul.f32 %v497, %v564
  %v610 = vmul.f32 %v498, %v569
  %v611 = vmul.f32 %v499, %v574
  %v612 = vmul.f32 %v500, %v579
  %v613 = vmul.f32 %v501, %v584
  %v614 = vmul.f32 %v502, %v589
  %v615 = vmul.f32 %v503, %v594
  %v616 = vmul.f32 %v504, %v599
  %v617 = vadd.f32 %v601, %v602
  %v618 = vadd.f32 %v617, %v603
  %v619 = vadd.f32 %v618, %v604
  %v620 = vadd.f32 %v619, %v605
  %v621 = vadd.f32 %v620, %v606
  %v622 = vadd.f32 %v621, %v607
  %v623 = vadd.f32 %v622, %v608
  %v624 = vadd.f32 %v623, %v609
  %v625 = vadd.f32 %v624, %v610
  %v626 = vadd.f32 %v625, %v611
  %v627 = vadd.f32 %v626, %v612
  %v628 = vadd.f32 %v627, %v613
  %v629 = vadd.f32 %v628, %v614
  %v630 = vadd.f32 %v629, %v615
  %v631 = vadd.f32 %v630, %v616
  %v632 = vrot.slane %v631, 4
  %v633 = vadd.f32 %v631, %v632
  %v634 = vrot.slane %v633, 2
  %v635 = vadd.f32 %v633, %v634
  %v636 = vrot.slane %v635, 1
  %v637 = vadd.f32 %v635, %v636
  %v638 = vld [vmem:[#allocation2] sm:$0x1]
  %640 = vset.pattern.permute.xlu0 0
  %641 = vperm.xlu0 %640, %v638
  %v642 = vpop.permute.xlu0 %641
  %v644 = vperm.slane %v642, 0
  %v645 = vadd.f32 %v637, %v644
  %646 = vst [vmem:[%s7] sm:$0x1] %v645
  // Predicated region
  $region30: #{bbb_mlp_forward.1} parent=0 // pred_check
    _
  $region31: #{bbb_mlp_forward.1} parent=0 // pred_check_branch
    %648 = sbr.rel (0) target = $region33
  $region32: #{bbb_mlp_forward.1} parent=0 // pred_region
    _
  $region33: #{bbb_mlp_forward.1} parent=0 // pred_fallthru
    _
  // Predicated region
  $region34: #{bbb_mlp_forward.1} parent=0 // pred_check
    _
  $region35: #{bbb_mlp_forward.1} parent=0 // pred_check_branch
    %650 = sbr.rel (0) target = $region37
  $region36: #{bbb_mlp_forward.1} parent=0 // pred_region
    _
  $region37: #{bbb_mlp_forward.1} parent=0 // pred_fallthru
    _

</llo_original>
